<compile_context>
chip_gen: v7x
topology: tpu7x:2x2x1
jax: 0.10.0
libtpu: 0.0.40
codegen_flags: <defaults>
</compile_context>

<pallas_src>
import jax
import jax.numpy as jnp
from jax.experimental import pallas as pl
from jax.experimental.pallas import tpu as pltpu

NEG_SLOPE = 0.01  # nn.LeakyReLU default negative_slope


def _leaky_relu(x):
    # negative_slope < 1  =>  LeakyReLU(x) == max(x, slope * x)  (2 VALU ops)
    return jnp.maximum(x, NEG_SLOPE * x)


def mlp_kernel(x_ref,
               w1_ref, b1_ref,
               w2_ref, b2_ref,
               w3_ref, b3_ref,
               w4_ref, b4_ref,
               o_ref):
    # fc1 + LeakyReLU  (F -> 31), applied to the raw input x (fc0 is discarded)
    h = jnp.dot(x_ref[...], w1_ref[...],
                preferred_element_type=jnp.float32) + b1_ref[...]
    h = _leaky_relu(h)
    # fc2 + LeakyReLU  (31 -> 23)
    h = jnp.dot(h, w2_ref[...], preferred_element_type=jnp.float32) + b2_ref[...]
    h = _leaky_relu(h)
    # fc3 + LeakyReLU  (23 -> 15)
    h = jnp.dot(h, w3_ref[...], preferred_element_type=jnp.float32) + b3_ref[...]
    h = _leaky_relu(h)
    # fc4              (15 -> num_classes)
    h = jnp.dot(h, w4_ref[...], preferred_element_type=jnp.float32) + b4_ref[...]
    o_ref[...] = h.astype(o_ref.dtype)


def _cost_estimate(B, x, weight_args):
    ws = weight_args[0::2]          # (w1, w2, w3, w4), each (in, out)
    flops = sum(2 * B * w.shape[0] * w.shape[1] for w in ws)
    out_f = ws[-1].shape[1]
    bytes_accessed = (x.size * x.dtype.itemsize
                      + sum(a.size * a.dtype.itemsize for a in weight_args)
                      + B * out_f * 4)
    return pl.CostEstimate(flops=flops, transcendentals=0,
                           bytes_accessed=bytes_accessed)


def neural_net_forward(x, params, *,
                       batch_tile=32768,
                       single_block_max_bytes=12 * 1024 * 1024,
                       compute_dtype=jnp.bfloat16):
    """Forward pass.

    x: (B, F) float32 (F = input_size = 31).
    params: dict of pre-transposed (in, out) weights and (1, out) f32 biases.
    compute_dtype: dtype for x and the weight matrices (default bf16; dots
      still accumulate in f32 and biases/activations stay f32). Pass
      jnp.float32 (or None) for exact f32 compute.
    """
    if compute_dtype is not None and x.dtype != compute_dtype:
        x = x.astype(compute_dtype)
    if compute_dtype is not None:
        params = dict(params)
        for k in ("w1", "w2", "w3", "w4"):
            params[k] = params[k].astype(compute_dtype)

    B, F = x.shape
    C = params["w4"].shape[1]
    weight_args = (params["w1"], params["b1"],
                   params["w2"], params["b2"],
                   params["w3"], params["b3"],
                   params["w4"], params["b4"])
    weight_bytes = sum(a.size * a.dtype.itemsize for a in weight_args)
    cost = _cost_estimate(B, x, weight_args)

    x_row_bytes = F * x.dtype.itemsize
    out_row_bytes = C * 4  # f32 output
    per_row = x_row_bytes + out_row_bytes

    # ---- single-block path: whole problem as one VMEM block, no grid -------
    # Compute is negligible, so losing pipelining costs nothing; skipping the
    # grid removes all per-step overhead for typical DQN batch sizes.
    working_set = B * per_row + weight_bytes
    if working_set <= single_block_max_bytes:
        in_specs = ([pl.BlockSpec((B, F), lambda: (0, 0))]
                    + [pl.BlockSpec(a.shape, lambda: (0, 0))
                       for a in weight_args])
        out_spec = pl.BlockSpec((B, C), lambda: (0, 0))
        return pl.pallas_call(
            mlp_kernel,
            out_shape=jax.ShapeDtypeStruct((B, C), jnp.float32),
            grid=(),
            in_specs=in_specs,
            out_specs=out_spec,
            cost_estimate=cost,
        )(x, *weight_args)

    # ---- gridded path: batch-tiled, ragged last tile handled by Pallas -----
    # Keep the double-buffered working set comfortably inside every chip's
    # scoped-VMEM budget; clamp the tile if the caller asks for too much.
    tb_cap = max(8, ((28 * 1024 * 1024 - 2 * weight_bytes) // (2 * per_row))
                 // 8 * 8)
    TB = max(8, min((batch_tile // 8) * 8, tb_cap))
    n_tiles = pl.cdiv(B, TB)          # ragged last tile: no pad, no out slice

    x_spec = pl.BlockSpec((TB, F), lambda i: (i, 0))
    # Constant index_map -> same (whole) weight block every step, so the
    # pipeline keeps the ~8 KB of weights VMEM-resident (no re-DMA).
    w_specs = [pl.BlockSpec(a.shape, lambda i: (0, 0)) for a in weight_args]
    out_spec = pl.BlockSpec((TB, C), lambda i: (i, 0))

    est_vmem = 2 * TB * per_row + 2 * weight_bytes + (1 << 20)
    ckwargs = {}
    if est_vmem > 14 * 1024 * 1024:
        # Only needed if the tile outgrows v5e's 16 MiB scoped default.
        ckwargs["vmem_limit_bytes"] = 32 * 1024 * 1024

    return pl.pallas_call(
        mlp_kernel,
        out_shape=jax.ShapeDtypeStruct((B, C), jnp.float32),
        grid=(n_tiles,),
        in_specs=[x_spec] + w_specs,
        out_specs=out_spec,
        compiler_params=pltpu.CompilerParams(
            dimension_semantics=("parallel",), **ckwargs),
        cost_estimate=cost,
    )(x, *weight_args)


def init_params(key, input_size=31, hidden_size=20, num_classes=2):
    """Deterministic init mimicking nn.Linear's U(-1/sqrt(fan_in), 1/sqrt(fan_in)).

    Weights are stored already transposed to (in_features, out_features).
    fc0 exists in the PyTorch module but its output is unused in forward(),
    so it is omitted here.
    """
    sizes = [(input_size, 31), (31, 23), (23, 15), (15, num_classes)]
    params = {}
    for i, (fan_in, fan_out) in enumerate(sizes, start=1):
        key, kw, kb = jax.random.split(key, 3)
        bound = 1.0 / jnp.sqrt(jnp.float32(fan_in))
        params[f"w{i}"] = jax.random.uniform(
            kw, (fan_in, fan_out), jnp.float32, minval=-bound, maxval=bound)
        params[f"b{i}"] = jax.random.uniform(
            kb, (1, fan_out), jnp.float32, minval=-bound, maxval=bound)
    return params


def reference_forward(x, params):
    """Plain-JAX reference mirroring the PyTorch forward (for sanity check)."""
    h = _leaky_relu(x @ params["w1"] + params["b1"])
    h = _leaky_relu(h @ params["w2"] + params["b2"])
    h = _leaky_relu(h @ params["w3"] + params["b3"])
    return h @ params["w4"] + params["b4"]


if __name__ == "__main__":
    key = jax.random.PRNGKey(0)
    key, kx_small, kx_big = jax.random.split(key, 3)

    input_size = 31
    num_classes = 2
    params = init_params(key, input_size=input_size, num_classes=num_classes)

    # --- small batch, exact f32 compute: single-block (grid=()) path --------
    x_small = jax.random.normal(kx_small, (8, input_size), dtype=jnp.float32)
    out_small = jax.block_until_ready(
        neural_net_forward(x_small, params, compute_dtype=jnp.float32))
    ref_small = reference_forward(x_small, params)
    assert out_small.shape == (8, num_classes), out_small.shape
    assert jnp.allclose(out_small, ref_small, atol=1e-5, rtol=1e-5), \
        "small-batch f32 mismatch vs reference"

    # --- small batch, default bf16 compute (looser tolerance expected) ------
    out_small_bf16 = jax.block_until_ready(neural_net_forward(x_small, params))
    assert jnp.allclose(out_small_bf16, ref_small, atol=5e-2, rtol=5e-2), \
        "small-batch bf16 mismatch vs reference"

    # --- force the gridded path with a ragged last tile (1000 % 256 != 0) ---
    x_big = jax.random.normal(kx_big, (1000, input_size), dtype=jnp.float32)
    out_big = jax.block_until_ready(
        neural_net_forward(x_big, params, compute_dtype=jnp.float32,
                           batch_tile=256, single_block_max_bytes=0))
    ref_big = reference_forward(x_big, params)
    assert out_big.shape == (1000, num_classes), out_big.shape
    assert jnp.allclose(out_big, ref_big, atol=1e-5, rtol=1e-5), \
        "gridded ragged-tile mismatch vs reference"

    print("KERNEL_OK")
</pallas_src>

<mosaic_0001>
module attributes {stable_mosaic.version = 11 : i64} {
  func.func @mlp_kernel(%arg0: memref<8x31xf32, #tpu.memory_space<vmem>>, %arg1: memref<31x31xf32, #tpu.memory_space<vmem>>, %arg2: memref<1x31xf32, #tpu.memory_space<vmem>>, %arg3: memref<31x23xf32, #tpu.memory_space<vmem>>, %arg4: memref<1x23xf32, #tpu.memory_space<vmem>>, %arg5: memref<23x15xf32, #tpu.memory_space<vmem>>, %arg6: memref<1x15xf32, #tpu.memory_space<vmem>>, %arg7: memref<15x2xf32, #tpu.memory_space<vmem>>, %arg8: memref<1x2xf32, #tpu.memory_space<vmem>>, %arg9: memref<8x2xf32, #tpu.memory_space<vmem>>) attributes {dimension_semantics = [], scalar_prefetch = 0 : i64, scratch_operands = 0 : i64, tpu.core_type = #tpu.core_type<tc>} {
    %c0 = arith.constant 0 : index
    %c0_0 = arith.constant 0 : index
    %0 = vector.load %arg0[%c0, %c0_0] : memref<8x31xf32, #tpu.memory_space<vmem>>, vector<8x31xf32>
    %c0_1 = arith.constant 0 : index
    %c0_2 = arith.constant 0 : index
    %1 = vector.load %arg1[%c0_1, %c0_2] : memref<31x31xf32, #tpu.memory_space<vmem>>, vector<31x31xf32>
    %cst = arith.constant dense<0.000000e+00> : vector<8x31xf32>
    %2 = tpu.matmul %0, %1, %cst {dimension_numbers = #tpu.dot_dimension_numbers<[1], [0], [0], [1], [0, 0, 1, 1], [], []>} : vector<8x31xf32>, vector<31x31xf32>, vector<8x31xf32> -> vector<8x31xf32>
    %c0_3 = arith.constant 0 : index
    %c0_4 = arith.constant 0 : index
    %3 = vector.load %arg2[%c0_3, %c0_4] : memref<1x31xf32, #tpu.memory_space<vmem>>, vector<1x31xf32>
    %4 = vector.broadcast %3 : vector<1x31xf32> to vector<8x31xf32>
    %5 = arith.addf %2, %4 : vector<8x31xf32>
    %cst_5 = arith.constant 0.00999999977 : f32
    %6 = vector.broadcast %cst_5 : f32 to vector<8x31xf32>
    %7 = arith.mulf %6, %5 : vector<8x31xf32>
    %8 = arith.maximumf %5, %7 : vector<8x31xf32>
    %c0_6 = arith.constant 0 : index
    %c0_7 = arith.constant 0 : index
    %9 = vector.load %arg3[%c0_6, %c0_7] : memref<31x23xf32, #tpu.memory_space<vmem>>, vector<31x23xf32>
    %cst_8 = arith.constant dense<0.000000e+00> : vector<8x23xf32>
    %10 = tpu.matmul %8, %9, %cst_8 {dimension_numbers = #tpu.dot_dimension_numbers<[1], [0], [0], [1], [0, 0, 1, 1], [], []>} : vector<8x31xf32>, vector<31x23xf32>, vector<8x23xf32> -> vector<8x23xf32>
    %c0_9 = arith.constant 0 : index
    %c0_10 = arith.constant 0 : index
    %11 = vector.load %arg4[%c0_9, %c0_10] : memref<1x23xf32, #tpu.memory_space<vmem>>, vector<1x23xf32>
    %12 = vector.broadcast %11 : vector<1x23xf32> to vector<8x23xf32>
    %13 = arith.addf %10, %12 : vector<8x23xf32>
    %cst_11 = arith.constant 0.00999999977 : f32
    %14 = vector.broadcast %cst_11 : f32 to vector<8x23xf32>
    %15 = arith.mulf %14, %13 : vector<8x23xf32>
    %16 = arith.maximumf %13, %15 : vector<8x23xf32>
    %c0_12 = arith.constant 0 : index
    %c0_13 = arith.constant 0 : index
    %17 = vector.load %arg5[%c0_12, %c0_13] : memref<23x15xf32, #tpu.memory_space<vmem>>, vector<23x15xf32>
    %cst_14 = arith.constant dense<0.000000e+00> : vector<8x15xf32>
    %18 = tpu.matmul %16, %17, %cst_14 {dimension_numbers = #tpu.dot_dimension_numbers<[1], [0], [0], [1], [0, 0, 1, 1], [], []>} : vector<8x23xf32>, vector<23x15xf32>, vector<8x15xf32> -> vector<8x15xf32>
    %c0_15 = arith.constant 0 : index
    %c0_16 = arith.constant 0 : index
    %19 = vector.load %arg6[%c0_15, %c0_16] : memref<1x15xf32, #tpu.memory_space<vmem>>, vector<1x15xf32>
    %20 = vector.broadcast %19 : vector<1x15xf32> to vector<8x15xf32>
    %21 = arith.addf %18, %20 : vector<8x15xf32>
    %cst_17 = arith.constant 0.00999999977 : f32
    %22 = vector.broadcast %cst_17 : f32 to vector<8x15xf32>
    %23 = arith.mulf %22, %21 : vector<8x15xf32>
    %24 = arith.maximumf %21, %23 : vector<8x15xf32>
    %c0_18 = arith.constant 0 : index
    %c0_19 = arith.constant 0 : index
    %25 = vector.load %arg7[%c0_18, %c0_19] : memref<15x2xf32, #tpu.memory_space<vmem>>, vector<15x2xf32>
    %cst_20 = arith.constant dense<0.000000e+00> : vector<8x2xf32>
    %26 = tpu.matmul %24, %25, %cst_20 {dimension_numbers = #tpu.dot_dimension_numbers<[1], [0], [0], [1], [0, 0, 1, 1], [], []>} : vector<8x15xf32>, vector<15x2xf32>, vector<8x2xf32> -> vector<8x2xf32>
    %c0_21 = arith.constant 0 : index
    %c0_22 = arith.constant 0 : index
    %27 = vector.load %arg8[%c0_21, %c0_22] : memref<1x2xf32, #tpu.memory_space<vmem>>, vector<1x2xf32>
    %28 = vector.broadcast %27 : vector<1x2xf32> to vector<8x2xf32>
    %29 = arith.addf %26, %28 : vector<8x2xf32>
    %c0_23 = arith.constant 0 : index
    %c0_24 = arith.constant 0 : index
    %30 = vector.load %arg9[%c0_23, %c0_24] : memref<8x2xf32, #tpu.memory_space<vmem>>, vector<8x2xf32>
    tpu.vector_store %arg9[%c0_23, %c0_24], %29 {strides = array<i32>} : memref<8x2xf32, #tpu.memory_space<vmem>>, vector<8x2xf32>,
    return
  }
}

</mosaic_0001>

<llo_original>
// kernel: tpu_custom_call.1
$region0: #{tpu_custom_call.1}
  #allocation0 [shape = 'u32[]', space=smem, size = 0x4, offset = 0x4, fixed_abs, tag = 'smem constant byte address 0x4 - core index']
  #allocation1 [shape = 'u32[144,128]{1,0:T(1,128)}', space=vmem, size = 0x12000, scoped, tag = 'internal scratch']
  %s0 = inlined_call_operand.vmem [shape: f32[8,31], index: 0, kind: input, shape index: {}]
  %s1 = inlined_call_operand.vmem [shape: f32[31,31], index: 1, kind: input, shape index: {}]
  %s2 = inlined_call_operand.vmem [shape: f32[1,31], index: 2, kind: input, shape index: {}]
  %s3 = inlined_call_operand.vmem [shape: f32[31,23], index: 3, kind: input, shape index: {}]
  %s4 = inlined_call_operand.vmem [shape: f32[1,23], index: 4, kind: input, shape index: {}]
  %s5 = inlined_call_operand.vmem [shape: f32[23,15], index: 5, kind: input, shape index: {}]
  %s6 = inlined_call_operand.vmem [shape: f32[1,15], index: 6, kind: input, shape index: {}]
  %s7 = inlined_call_operand.vmem [shape: f32[15,2], index: 7, kind: input, shape index: {}]
  %s8 = inlined_call_operand.vmem [shape: f32[1,2], index: 8, kind: input, shape index: {}]
  %s9 = inlined_call_operand.vmem [shape: f32[8,2], index: 9, kind: output, shape index: {}]
  %s10 = sld [smem:[#allocation0]]
  $region46: #{tpu_custom_call.1} parent=0
    _
  %s12 = ssub.s32 1, %s10
  %s13 = scalar_select 0, %s12, %s10
  // Predicated region
  $region2: #{tpu_custom_call.1} parent=0 // pred_check
    _
  $region3: #{tpu_custom_call.1} parent=0 // pred_check_branch
    %15 = sbr.rel (0) target = $region5
  $region4: #{tpu_custom_call.1} parent=0 // pred_region
    _
  $region5: #{tpu_custom_call.1} parent=0 // pred_fallthru
    _
  // Predicated region
  $region6: #{tpu_custom_call.1} parent=0 // pred_check
    _
  $region7: #{tpu_custom_call.1} parent=0 // pred_check_branch
    %17 = sbr.rel (0) target = $region9
  $region8: #{tpu_custom_call.1} parent=0 // pred_region
    _
  $region9: #{tpu_custom_call.1} parent=0 // pred_fallthru
    _
  // Predicated region
  $region10: #{tpu_custom_call.1} parent=0 // pred_check
    _
  $region11: #{tpu_custom_call.1} parent=0 // pred_check_branch
    %19 = sbr.rel (0) target = $region13
  $region12: #{tpu_custom_call.1} parent=0 // pred_region
    _
  $region13: #{tpu_custom_call.1} parent=0 // pred_fallthru
    _
  // Predicated region
  $region14: #{tpu_custom_call.1} parent=0 // pred_check
    _
  $region15: #{tpu_custom_call.1} parent=0 // pred_check_branch
    %21 = sbr.rel (0) target = $region17
  $region16: #{tpu_custom_call.1} parent=0 // pred_region
    _
  $region17: #{tpu_custom_call.1} parent=0 // pred_fallthru
    _
  // Predicated region
  $region18: #{tpu_custom_call.1} parent=0 // pred_check
    _
  $region19: #{tpu_custom_call.1} parent=0 // pred_check_branch
    %23 = sbr.rel (0) target = $region21
  $region20: #{tpu_custom_call.1} parent=0 // pred_region
    _
  $region21: #{tpu_custom_call.1} parent=0 // pred_fallthru
    _
  // Predicated region
  $region22: #{tpu_custom_call.1} parent=0 // pred_check
    _
  $region23: #{tpu_custom_call.1} parent=0 // pred_check_branch
    %25 = sbr.rel (0) target = $region25
  $region24: #{tpu_custom_call.1} parent=0 // pred_region
    _
  $region25: #{tpu_custom_call.1} parent=0 // pred_fallthru
    _
  // Predicated region
  $region26: #{tpu_custom_call.1} parent=0 // pred_check
    _
  $region27: #{tpu_custom_call.1} parent=0 // pred_check_branch
    %27 = sbr.rel (0) target = $region29
  $region28: #{tpu_custom_call.1} parent=0 // pred_region
    _
  $region29: #{tpu_custom_call.1} parent=0 // pred_fallthru
    _
  // Predicated region
  $region30: #{tpu_custom_call.1} parent=0 // pred_check
    _
  $region31: #{tpu_custom_call.1} parent=0 // pred_check_branch
    %29 = sbr.rel (0) target = $region33
  $region32: #{tpu_custom_call.1} parent=0 // pred_region
    _
  $region33: #{tpu_custom_call.1} parent=0 // pred_fallthru
    _
  // Predicated region
  $region34: #{tpu_custom_call.1} parent=0 // pred_check
    _
  $region35: #{tpu_custom_call.1} parent=0 // pred_check_branch
    %31 = sbr.rel (0) target = $region37
  $region36: #{tpu_custom_call.1} parent=0 // pred_region
    _
  $region37: #{tpu_custom_call.1} parent=0 // pred_fallthru
    _
  %v32 = vld [vmem:[%s0] sm:$0xff]
  %v33 = vld [vmem:[%s1] sm:$0xff]
  %v34 = vld [vmem:[%s1 + $0x8] sm:$0xff]
  %v35 = vld [vmem:[%s1 + $0x10] sm:$0xff]
  %v36 = vld [vmem:[%s1 + $0x18] sm:$0x7f]
  %v37 = vld [vmem:[%s2] sm:$0x1]
  %v39 = vlaneseq
  %v40 = vshrl.u32 %v39, 7
  %v41 = vsub.s32 0, %v40
  %v42 = vrot.slane %v37, %v41
  %vm44 = vcmask 252928
  %v46 = vsel %vm44, %v32, 0
  %vm48 = vcmask 1046528
  %v50 = vsel %vm48, %v36, 0
  %52 = vmatprep.subr.mxu0 0.0
  %53 = vmatpush1.msra.mxu0 %v33
  %54 = vmatprep.subr.mxu0 0.0
  %55 = vmatpush1.msra.mxu0 %v34
  %56 = vmatprep.subr.mxu0 0.0
  %57 = vmatpush1.msra.mxu0 %v35
  %58 = vmatprep.subr.mxu0 0.0
  %59 = vmatpush1.msra.mxu0 %v50
  %60 = vmatprep.subr.mxu0 0.0
  %61 = vmatpush1.msra.mxu0 0.0
  %62 = vmatprep.subr.mxu0 0.0
  %63 = vmatpush1.msra.mxu0 0.0
  %64 = vmatprep.subr.mxu0 0.0
  %65 = vmatpush1.msra.mxu0 0.0
  %66 = vmatprep.subr.mxu0 0.0
  %67 = vmatpush1.msra.mxu0 0.0
  %68 = vmatprep.subr.mxu0 0.0
  %69 = vmatpush1.msra.mxu0 0.0
  %70 = vmatprep.subr.mxu0 0.0
  %71 = vmatpush1.msra.mxu0 0.0
  %72 = vmatprep.subr.mxu0 0.0
  %73 = vmatpush1.msra.mxu0 0.0
  %74 = vmatprep.subr.mxu0 0.0
  %75 = vmatpush1.msra.mxu0 0.0
  %76 = vmatprep.subr.mxu0 0.0
  %77 = vmatpush1.msra.mxu0 0.0
  %78 = vmatprep.subr.mxu0 0.0
  %79 = vmatpush1.msra.mxu0 0.0
  %80 = vmatprep.subr.mxu0 0.0
  %81 = vmatpush1.msra.mxu0 0.0
  %82 = vmatprep.subr.mxu0 0.0
  %83 = vmatpush1.msra.mxu0 0.0
  %84 = vmatprep.subr.mxu0 0.0
  %85 = vmatpush1.msra.mxu0 0.0
  %86 = vmatprep.subr.mxu0 0.0
  %87 = vmatpush1.msra.mxu0 0.0
  %88 = vmatprep.subr.mxu0 0.0
  %89 = vmatpush1.msra.mxu0 0.0
  %90 = vmatprep.subr.mxu0 0.0
  %91 = vmatpush1.msra.mxu0 0.0
  %92 = vmatprep.subr.mxu0 0.0
  %93 = vmatpush1.msra.mxu0 0.0
  %94 = vmatprep.subr.mxu0 0.0
  %95 = vmatpush1.msra.mxu0 0.0
  %96 = vmatprep.subr.mxu0 0.0
  %97 = vmatpush1.msra.mxu0 0.0
  %98 = vmatprep.subr.mxu0 0.0
  %99 = vmatpush1.msra.mxu0 0.0
  %100 = vmatprep.subr.mxu0 0.0
  %101 = vmatpush1.msra.mxu0 0.0
  %102 = vmatprep.subr.mxu0 0.0
  %103 = vmatpush1.msra.mxu0 0.0
  %104 = vmatprep.subr.mxu0 0.0
  %105 = vmatpush1.msra.mxu0 0.0
  %106 = vmatprep.subr.mxu0 0.0
  %107 = vmatpush1.msra.mxu0 0.0
  %108 = vmatprep.subr.mxu0 0.0
  %109 = vmatpush1.msra.mxu0 0.0
  %110 = vmatprep.subr.mxu0 0.0
  %111 = vmatpush1.msra.mxu0 0.0
  %112 = vmatprep.subr.mxu0 0.0
  %113 = vmatpush1.msra.mxu0 0.0
  %114 = vmatprep.subr.mxu0 0.0
  %115 = vmatpush1.msra.mxu0 0.0
  %116 = vmatprep.mubr.f32.mxu0 0.0
  %117 = vmatmul.mubr.f32.gmra.mrb[0].mxu0 %v46
  %v118 = vpop.f32.mrb[0].mxu0
  %v119 = vadd.f32 %v42, %v118
  %v120 = vpop.f32.mrb[0].mxu0
  %121 = vdwg.mxu0
  %v122 = vmul.f32 %v119, 0.01
  %v123 = vmax.f32 %v119, %v122
  %v124 = vld [vmem:[%s3] sm:$0xff]
  %v125 = vld [vmem:[%s3 + $0x8] sm:$0xff]
  %v126 = vld [vmem:[%s3 + $0x10] sm:$0xff]
  %v127 = vld [vmem:[%s3 + $0x18] sm:$0x7f]
  %v128 = vld [vmem:[%s4] sm:$0x1]
  %v130 = vlaneseq
  %v131 = vshrl.u32 %v130, 7
  %v132 = vsub.s32 0, %v131
  %v133 = vrot.slane %v128, %v132
  %v136 = vsel %vm44, %v123, 0
  %v139 = vsel %vm48, %v127, 0
  %141 = vmatprep.subr.mxu0 0.0
  %142 = vmatpush1.msra.mxu0 %v124
  %143 = vmatprep.subr.mxu0 0.0
  %144 = vmatpush1.msra.mxu0 %v125
  %145 = vmatprep.subr.mxu0 0.0
  %146 = vmatpush1.msra.mxu0 %v126
  %147 = vmatprep.subr.mxu0 0.0
  %148 = vmatpush1.msra.mxu0 %v139
  %149 = vmatprep.subr.mxu0 0.0
  %150 = vmatpush1.msra.mxu0 0.0
  %151 = vmatprep.subr.mxu0 0.0
  %152 = vmatpush1.msra.mxu0 0.0
  %153 = vmatprep.subr.mxu0 0.0
  %154 = vmatpush1.msra.mxu0 0.0
  %155 = vmatprep.subr.mxu0 0.0
  %156 = vmatpush1.msra.mxu0 0.0
  %157 = vmatprep.subr.mxu0 0.0
  %158 = vmatpush1.msra.mxu0 0.0
  %159 = vmatprep.subr.mxu0 0.0
  %160 = vmatpush1.msra.mxu0 0.0
  %161 = vmatprep.subr.mxu0 0.0
  %162 = vmatpush1.msra.mxu0 0.0
  %163 = vmatprep.subr.mxu0 0.0
  %164 = vmatpush1.msra.mxu0 0.0
  %165 = vmatprep.subr.mxu0 0.0
  %166 = vmatpush1.msra.mxu0 0.0
  %167 = vmatprep.subr.mxu0 0.0
  %168 = vmatpush1.msra.mxu0 0.0
  %169 = vmatprep.subr.mxu0 0.0
  %170 = vmatpush1.msra.mxu0 0.0
  %171 = vmatprep.subr.mxu0 0.0
  %172 = vmatpush1.msra.mxu0 0.0
  %173 = vmatprep.subr.mxu0 0.0
  %174 = vmatpush1.msra.mxu0 0.0
  %175 = vmatprep.subr.mxu0 0.0
  %176 = vmatpush1.msra.mxu0 0.0
  %177 = vmatprep.subr.mxu0 0.0
  %178 = vmatpush1.msra.mxu0 0.0
  %179 = vmatprep.subr.mxu0 0.0
  %180 = vmatpush1.msra.mxu0 0.0
  %181 = vmatprep.subr.mxu0 0.0
  %182 = vmatpush1.msra.mxu0 0.0
  %183 = vmatprep.subr.mxu0 0.0
  %184 = vmatpush1.msra.mxu0 0.0
  %185 = vmatprep.subr.mxu0 0.0
  %186 = vmatpush1.msra.mxu0 0.0
  %187 = vmatprep.subr.mxu0 0.0
  %188 = vmatpush1.msra.mxu0 0.0
  %189 = vmatprep.subr.mxu0 0.0
  %190 = vmatpush1.msra.mxu0 0.0
  %191 = vmatprep.subr.mxu0 0.0
  %192 = vmatpush1.msra.mxu0 0.0
  %193 = vmatprep.subr.mxu0 0.0
  %194 = vmatpush1.msra.mxu0 0.0
  %195 = vmatprep.subr.mxu0 0.0
  %196 = vmatpush1.msra.mxu0 0.0
  %197 = vmatprep.subr.mxu0 0.0
  %198 = vmatpush1.msra.mxu0 0.0
  %199 = vmatprep.subr.mxu0 0.0
  %200 = vmatpush1.msra.mxu0 0.0
  %201 = vmatprep.subr.mxu0 0.0
  %202 = vmatpush1.msra.mxu0 0.0
  %203 = vmatprep.subr.mxu0 0.0
  %204 = vmatpush1.msra.mxu0 0.0
  %205 = vmatprep.mubr.f32.mxu0 0.0
  %206 = vmatmul.mubr.f32.gmra.mrb[0].mxu0 %v136
  %v207 = vpop.f32.mrb[0].mxu0
  %v208 = vadd.f32 %v133, %v207
  %v209 = vpop.f32.mrb[0].mxu0
  %210 = vdwg.mxu0
  %v211 = vmul.f32 %v208, 0.01
  %v212 = vmax.f32 %v208, %v211
  %v213 = vld [vmem:[%s5] sm:$0xff]
  %v214 = vld [vmem:[%s5 + $0x8] sm:$0xff]
  %v215 = vld [vmem:[%s5 + $0x10] sm:$0x7f]
  %v216 = vld [vmem:[%s6] sm:$0x1]
  %v218 = vlaneseq
  %v219 = vshrl.u32 %v218, 7
  %v220 = vsub.s32 0, %v219
  %v221 = vrot.slane %v216, %v220
  %vm223 = vcmask 187392
  %v225 = vsel %vm223, %v212, 0
  %v228 = vsel %vm48, %v215, 0
  %230 = vmatprep.subr.mxu0 0.0
  %231 = vmatpush1.msra.mxu0 %v213
  %232 = vmatprep.subr.mxu0 0.0
  %233 = vmatpush1.msra.mxu0 %v214
  %234 = vmatprep.subr.mxu0 0.0
  %235 = vmatpush1.msra.mxu0 %v228
  %236 = vmatprep.subr.mxu0 0.0
  %237 = vmatpush1.msra.mxu0 0.0
  %238 = vmatprep.subr.mxu0 0.0
  %239 = vmatpush1.msra.mxu0 0.0
  %240 = vmatprep.subr.mxu0 0.0
  %241 = vmatpush1.msra.mxu0 0.0
  %242 = vmatprep.subr.mxu0 0.0
  %243 = vmatpush1.msra.mxu0 0.0
  %244 = vmatprep.subr.mxu0 0.0
  %245 = vmatpush1.msra.mxu0 0.0
  %246 = vmatprep.subr.mxu0 0.0
  %247 = vmatpush1.msra.mxu0 0.0
  %248 = vmatprep.subr.mxu0 0.0
  %249 = vmatpush1.msra.mxu0 0.0
  %250 = vmatprep.subr.mxu0 0.0
  %251 = vmatpush1.msra.mxu0 0.0
  %252 = vmatprep.subr.mxu0 0.0
  %253 = vmatpush1.msra.mxu0 0.0
  %254 = vmatprep.subr.mxu0 0.0
  %255 = vmatpush1.msra.mxu0 0.0
  %256 = vmatprep.subr.mxu0 0.0
  %257 = vmatpush1.msra.mxu0 0.0
  %258 = vmatprep.subr.mxu0 0.0
  %259 = vmatpush1.msra.mxu0 0.0
  %260 = vmatprep.subr.mxu0 0.0
  %261 = vmatpush1.msra.mxu0 0.0
  %262 = vmatprep.subr.mxu0 0.0
  %263 = vmatpush1.msra.mxu0 0.0
  %264 = vmatprep.subr.mxu0 0.0
  %265 = vmatpush1.msra.mxu0 0.0
  %266 = vmatprep.subr.mxu0 0.0
  %267 = vmatpush1.msra.mxu0 0.0
  %268 = vmatprep.subr.mxu0 0.0
  %269 = vmatpush1.msra.mxu0 0.0
  %270 = vmatprep.subr.mxu0 0.0
  %271 = vmatpush1.msra.mxu0 0.0
  %272 = vmatprep.subr.mxu0 0.0
  %273 = vmatpush1.msra.mxu0 0.0
  %274 = vmatprep.subr.mxu0 0.0
  %275 = vmatpush1.msra.mxu0 0.0
  %276 = vmatprep.subr.mxu0 0.0
  %277 = vmatpush1.msra.mxu0 0.0
  %278 = vmatprep.subr.mxu0 0.0
  %279 = vmatpush1.msra.mxu0 0.0
  %280 = vmatprep.subr.mxu0 0.0
  %281 = vmatpush1.msra.mxu0 0.0
  %282 = vmatprep.subr.mxu0 0.0
  %283 = vmatpush1.msra.mxu0 0.0
  %284 = vmatprep.subr.mxu0 0.0
  %285 = vmatpush1.msra.mxu0 0.0
  %286 = vmatprep.subr.mxu0 0.0
  %287 = vmatpush1.msra.mxu0 0.0
  %288 = vmatprep.subr.mxu0 0.0
  %289 = vmatpush1.msra.mxu0 0.0
  %290 = vmatprep.subr.mxu0 0.0
  %291 = vmatpush1.msra.mxu0 0.0
  %292 = vmatprep.subr.mxu0 0.0
  %293 = vmatpush1.msra.mxu0 0.0
  %294 = vmatprep.mubr.f32.mxu0 0.0
  %295 = vmatmul.mubr.f32.gmra.mrb[0].mxu0 %v225
  %v296 = vpop.f32.mrb[0].mxu0
  %v297 = vadd.f32 %v221, %v296
  %v298 = vpop.f32.mrb[0].mxu0
  %299 = vdwg.mxu0
  %v300 = vmul.f32 %v297, 0.01
  %v301 = vmax.f32 %v297, %v300
  %v302 = vld [vmem:[%s7] sm:$0xff]
  %v303 = vld [vmem:[%s7 + $0x8] sm:$0x7f]
  %v304 = vld [vmem:[%s8] sm:$0x1]
  %v306 = vlaneseq
  %v307 = vshrl.u32 %v306, 7
  %v308 = vsub.s32 0, %v307
  %v309 = vrot.slane %v304, %v308
  %vm311 = vcmask 121856
  %v313 = vsel %vm311, %v301, 0
  %v316 = vsel %vm48, %v303, 0
  %318 = vmatprep.subr.mxu0 0.0
  %319 = vmatpush1.msra.mxu0 %v302
  %320 = vmatprep.subr.mxu0 0.0
  %321 = vmatpush1.msra.mxu0 %v316
  %322 = vmatprep.subr.mxu0 0.0
  %323 = vmatpush1.msra.mxu0 0.0
  %324 = vmatprep.subr.mxu0 0.0
  %325 = vmatpush1.msra.mxu0 0.0
  %326 = vmatprep.subr.mxu0 0.0
  %327 = vmatpush1.msra.mxu0 0.0
  %328 = vmatprep.subr.mxu0 0.0
  %329 = vmatpush1.msra.mxu0 0.0
  %330 = vmatprep.subr.mxu0 0.0
  %331 = vmatpush1.msra.mxu0 0.0
  %332 = vmatprep.subr.mxu0 0.0
  %333 = vmatpush1.msra.mxu0 0.0
  %334 = vmatprep.subr.mxu0 0.0
  %335 = vmatpush1.msra.mxu0 0.0
  %336 = vmatprep.subr.mxu0 0.0
  %337 = vmatpush1.msra.mxu0 0.0
  %338 = vmatprep.subr.mxu0 0.0
  %339 = vmatpush1.msra.mxu0 0.0
  %340 = vmatprep.subr.mxu0 0.0
  %341 = vmatpush1.msra.mxu0 0.0
  %342 = vmatprep.subr.mxu0 0.0
  %343 = vmatpush1.msra.mxu0 0.0
  %344 = vmatprep.subr.mxu0 0.0
  %345 = vmatpush1.msra.mxu0 0.0
  %346 = vmatprep.subr.mxu0 0.0
  %347 = vmatpush1.msra.mxu0 0.0
  %348 = vmatprep.subr.mxu0 0.0
  %349 = vmatpush1.msra.mxu0 0.0
  %350 = vmatprep.subr.mxu0 0.0
  %351 = vmatpush1.msra.mxu0 0.0
  %352 = vmatprep.subr.mxu0 0.0
  %353 = vmatpush1.msra.mxu0 0.0
  %354 = vmatprep.subr.mxu0 0.0
  %355 = vmatpush1.msra.mxu0 0.0
  %356 = vmatprep.subr.mxu0 0.0
  %357 = vmatpush1.msra.mxu0 0.0
  %358 = vmatprep.subr.mxu0 0.0
  %359 = vmatpush1.msra.mxu0 0.0
  %360 = vmatprep.subr.mxu0 0.0
  %361 = vmatpush1.msra.mxu0 0.0
  %362 = vmatprep.subr.mxu0 0.0
  %363 = vmatpush1.msra.mxu0 0.0
  %364 = vmatprep.subr.mxu0 0.0
  %365 = vmatpush1.msra.mxu0 0.0
  %366 = vmatprep.subr.mxu0 0.0
  %367 = vmatpush1.msra.mxu0 0.0
  %368 = vmatprep.subr.mxu0 0.0
  %369 = vmatpush1.msra.mxu0 0.0
  %370 = vmatprep.subr.mxu0 0.0
  %371 = vmatpush1.msra.mxu0 0.0
  %372 = vmatprep.subr.mxu0 0.0
  %373 = vmatpush1.msra.mxu0 0.0
  %374 = vmatprep.subr.mxu0 0.0
  %375 = vmatpush1.msra.mxu0 0.0
  %376 = vmatprep.subr.mxu0 0.0
  %377 = vmatpush1.msra.mxu0 0.0
  %378 = vmatprep.subr.mxu0 0.0
  %379 = vmatpush1.msra.mxu0 0.0
  %380 = vmatprep.subr.mxu0 0.0
  %381 = vmatpush1.msra.mxu0 0.0
  %382 = vmatprep.mubr.f32.mxu0 0.0
  %383 = vmatmul.mubr.f32.gmra.mrb[0].mxu0 %v313
  %v384 = vpop.f32.mrb[0].mxu0
  %v385 = vadd.f32 %v309, %v384
  %v386 = vpop.f32.mrb[0].mxu0
  %387 = vdwg.mxu0
  %vm388 = vcmask 15360
  %389 = vst.msk [vmem:[%s9] sm:$0xff] %vm388, %v385
  // Predicated region
  $region38: #{tpu_custom_call.1} parent=0 // pred_check
    _
  $region39: #{tpu_custom_call.1} parent=0 // pred_check_branch
    %391 = sbr.rel (0) target = $region41
  $region40: #{tpu_custom_call.1} parent=0 // pred_region
    _
  $region41: #{tpu_custom_call.1} parent=0 // pred_fallthru
    _
  // Predicated region
  $region42: #{tpu_custom_call.1} parent=0 // pred_check
    _
  $region43: #{tpu_custom_call.1} parent=0 // pred_check_branch
    %393 = sbr.rel (0) target = $region45
  $region44: #{tpu_custom_call.1} parent=0 // pred_region
    _
  $region45: #{tpu_custom_call.1} parent=0 // pred_fallthru
    _

</llo_original>
